<compile_context>
chip_gen: v7x
topology: tpu7x:2x2x1
jax: 0.10.0
libtpu: 0.0.40
codegen_flags: <defaults>
</compile_context>

<pallas_src>
import functools

import jax
import jax.numpy as jnp
from jax.experimental import pallas as pl
from jax.experimental.pallas import tpu as pltpu


def _round_up(x, m):
    return (x + m - 1) // m * m


def _lifted_kernel(a_ref, b_ref, la_ref, na_ref, cs_ref, o_ref, acc_ref,
                   *, margin, ti, tj):
    i = pl.program_id(0)
    j = pl.program_id(1)

    @pl.when(j == 0)
    def _():
        acc_ref[...] = jnp.zeros_like(acc_ref)

    a = a_ref[...]                                   # (TI, D) bf16
    b = b_ref[...]                                   # (TJ, D) bf16

    # Pairwise squared distances via the Gram matrix (MXU, f32 accumulate).
    # Contract on the last dim of both operands -> no explicit RHS transpose.
    g = jax.lax.dot_general(a, b, (((1,), (1,)), ((), ())),
                            preferred_element_type=jnp.float32)   # (TI, TJ)
    d2 = na_ref[...] + (cs_ref[1:2, :] - 2.0 * g)                 # (TI, TJ)
    d = jnp.sqrt(jnp.maximum(d2, 0.0))

    # +cv for same-label pairs, -cv otherwise; cv zeroes padded columns, so the
    # validity mask costs no extra full-tile op.
    cv = cs_ref[2:3, :]                                           # (1, TJ)
    same = la_ref[...] == cs_ref[0:1, :]                          # (TI, TJ)
    dw = d * jnp.where(same, cv, -cv)

    # Per-row (pos_sum - neg_sum) partial accumulation.
    acc_ref[...] += jnp.sum(dw, axis=1, keepdims=True)            # (TI, 1)

    # Remove the (numerically noisy) diagonal contribution, but only on tiles
    # that actually intersect the global diagonal (cdist(i, i) is exactly 0).
    @pl.when(jnp.logical_and(i * ti < (j + 1) * tj, j * tj < (i + 1) * ti))
    def _():
        row_g = i * ti + jax.lax.broadcasted_iota(jnp.int32, (ti, tj), 0)
        col_g = j * tj + jax.lax.broadcasted_iota(jnp.int32, (ti, tj), 1)
        diag = jnp.where(row_g == col_g, dw, 0.0)
        acc_ref[...] -= jnp.sum(diag, axis=1, keepdims=True)

    @pl.when(j == pl.num_programs(1) - 1)
    def _():
        o_ref[...] = jnp.maximum(margin + acc_ref[...], 0.0).astype(o_ref.dtype)


def lifted_structured_loss_pallas(embeddings, labels, margin=1.0):
    """embeddings: (N, D) float, labels: (N,) int -> scalar loss."""
    embeddings = embeddings.astype(jnp.float32)
    labels = labels.astype(jnp.int32)
    n, dim = embeddings.shape

    # Tile selection: (8, 128)-legal, big enough to amortize the per-grid-step
    # overhead, and with a live-VMEM footprint small enough for v7x (64 MiB).
    if n <= 512:
        n_pad = _round_up(n, 16)
        tj = n_pad
        ti = max(8, n_pad // 2)         # >= 2 row blocks -> both v7x TCs busy
    else:
        ti = 256
        tj = 2048 if n >= 4096 else (1024 if n >= 2048 else 512)
        while tj > 512 and tj * dim * 2 > 4 * 1024 * 1024:
            tj //= 2                    # keep the bf16 column block modest
        n_pad = _round_up(n, tj)        # tj is a multiple of ti

    pad = n_pad - n
    emb = jnp.pad(embeddings, ((0, pad), (0, 0)))
    norms = jnp.sum(emb * emb, axis=1)                      # f32, exact
    emb_bf16 = emb.astype(jnp.bfloat16)                     # MXU operands only

    lab_f = jnp.pad(labels, (0, pad)).astype(jnp.float32)   # exact for |l| < 2^24
    la = lab_f.reshape(n_pad, 1)
    na = norms.reshape(n_pad, 1)
    cv = (jnp.arange(n_pad) < n).astype(jnp.float32)

    # Column-side data stacked into one 8-sublane-aligned slab:
    #   row 0: labels, row 1: |e|^2, row 2: validity, rows 3-7: padding.
    col_side = jnp.zeros((8, n_pad), jnp.float32)
    col_side = col_side.at[0].set(lab_f).at[1].set(norms).at[2].set(cv)

    grid = (n_pad // ti, n_pad // tj)
    kernel = functools.partial(_lifted_kernel, margin=float(margin), ti=ti, tj=tj)

    cost = pl.CostEstimate(
        flops=int(2 * n_pad * n_pad * dim + 8 * n_pad * n_pad),
        transcendentals=int(n_pad * n_pad),
        bytes_accessed=int(2 * n_pad * dim * (1 + grid[0])
                           + 4 * 8 * n_pad * grid[0] + 4 * 3 * n_pad),
    )

    per_row = pl.pallas_call(
        kernel,
        out_shape=jax.ShapeDtypeStruct((n_pad, 1), jnp.float32),
        grid_spec=pltpu.PrefetchScalarGridSpec(
            num_scalar_prefetch=0,
            grid=grid,
            in_specs=[
                pl.BlockSpec((ti, dim), lambda i, j: (i, 0)),   # row embeddings (bf16)
                pl.BlockSpec((tj, dim), lambda i, j: (j, 0)),   # col embeddings (bf16)
                pl.BlockSpec((ti, 1), lambda i, j: (i, 0)),     # row labels (f32)
                pl.BlockSpec((ti, 1), lambda i, j: (i, 0)),     # row |e|^2 (f32)
                pl.BlockSpec((8, tj), lambda i, j: (0, j)),     # col labels/|e|^2/valid
            ],
            out_specs=pl.BlockSpec((ti, 1), lambda i, j: (i, 0)),
            scratch_shapes=[pltpu.VMEM((ti, 1), jnp.float32)],
        ),
        compiler_params=pltpu.CompilerParams(
            dimension_semantics=("parallel", "arbitrary"),
            vmem_limit_bytes=40 * 1024 * 1024,
        ),
        cost_estimate=cost,
    )(emb_bf16, emb_bf16, la, na, col_side)

    # Tiny final reduction (mean of N hinge terms) stays in XLA.
    # TODO(synk): the (n_pad, 1) hinge output is a lane-sparse store; volume is
    # only N floats, so it is deliberately left as-is.
    return jnp.mean(per_row[:n, 0])


def lifted_structured_loss_reference(embeddings, labels, margin=1.0):
    """Pure-JAX reference mirroring the torch forward (cdist-style distances)."""
    diff = embeddings[:, None, :] - embeddings[None, :, :]
    distances = jnp.sqrt(jnp.sum(diff * diff, axis=-1))
    mask = labels[None, :] == labels[:, None]
    pos_sum = jnp.sum(jnp.where(mask, distances, 0.0), axis=1)
    neg_sum = jnp.sum(jnp.where(mask, 0.0, distances), axis=1)
    return jnp.mean(jnp.maximum(margin + pos_sum - neg_sum, 0.0))


if __name__ == "__main__":
    key = jax.random.PRNGKey(0)
    k1, k2 = jax.random.split(key)

    # Small case: mixed labels so both relu branches (active / clipped) fire.
    n, dim = 8, 128
    embeddings = jax.random.normal(k1, (n, dim), dtype=jnp.float32)
    labels = jnp.array([0, 0, 0, 0, 0, 0, 1, 1], dtype=jnp.int32)

    loss = lifted_structured_loss_pallas(embeddings, labels, margin=1.0)
    jax.block_until_ready(loss)
    loss_ref = lifted_structured_loss_reference(embeddings, labels, margin=1.0)
    assert loss.shape == ()
    assert jnp.allclose(loss, loss_ref, atol=1e-2, rtol=1e-2), (loss, loss_ref)

    # Mid-size case: exercises the multi-block tiled path (padding, diagonal
    # pl.when correction, column-validity masking, several row/col blocks).
    n2, dim2 = 520, 32
    emb2 = jax.random.normal(k2, (n2, dim2), dtype=jnp.float32)
    lab2 = (jnp.arange(n2) % 5 == 0).astype(jnp.int32)
    loss2 = lifted_structured_loss_pallas(emb2, lab2, margin=1.0)
    jax.block_until_ready(loss2)
    loss2_ref = lifted_structured_loss_reference(emb2, lab2, margin=1.0)
    assert jnp.allclose(loss2, loss2_ref, atol=5e-2, rtol=1e-2), (loss2, loss2_ref)

    print("KERNEL_OK")
</pallas_src>

<mosaic_0001>
module attributes {stable_mosaic.version = 11 : i64} {
  func.func @_lifted_kernel(%arg0: i32, %arg1: i32, %arg2: memref<8x128xbf16, #tpu.memory_space<vmem>>, %arg3: memref<16x128xbf16, #tpu.memory_space<vmem>>, %arg4: memref<8x1xf32, #tpu.memory_space<vmem>>, %arg5: memref<8x1xf32, #tpu.memory_space<vmem>>, %arg6: memref<8x16xf32, #tpu.memory_space<vmem>>, %arg7: memref<8x1xf32, #tpu.memory_space<vmem>>, %arg8: memref<8x1xf32, #tpu.memory_space<vmem>>) attributes {dimension_semantics = [#tpu.dimension_semantics<parallel>, #tpu.dimension_semantics<arbitrary>], iteration_bounds = array<i64: 2, 1>, scalar_prefetch = 0 : i64, scratch_operands = 1 : i64, tpu.core_type = #tpu.core_type<tc>, window_params = [{transform_indices = @transform_0, window_bounds = array<i64: 8, 128>}, {transform_indices = @transform_1, window_bounds = array<i64: 16, 128>}, {transform_indices = @transform_2, window_bounds = array<i64: 8, 1>}, {transform_indices = @transform_3, window_bounds = array<i64: 8, 1>}, {transform_indices = @transform_4, window_bounds = array<i64: 8, 16>}, {transform_indices = @transform_5, window_bounds = array<i64: 8, 1>}]} {
    %c0_i32 = arith.constant 0 : i32
    %0 = arith.cmpi eq, %arg1, %c0_i32 : i32
    %1 = arith.extui %0 : i1 to i32
    %c0_i32_0 = arith.constant 0 : i32
    %2 = arith.cmpi ne, %1, %c0_i32_0 : i32
    scf.if %2 {
      %cst_26 = arith.constant 0.000000e+00 : f32
      %50 = vector.broadcast %cst_26 : f32 to vector<8x1xf32>
      %c0_27 = arith.constant 0 : index
      %c0_28 = arith.constant 0 : index
      %51 = vector.load %arg8[%c0_27, %c0_28] : memref<8x1xf32, #tpu.memory_space<vmem>>, vector<8x1xf32>
      tpu.vector_store %arg8[%c0_27, %c0_28], %50 {strides = array<i32>} : memref<8x1xf32, #tpu.memory_space<vmem>>, vector<8x1xf32>,
    } else {
    }
    %c0 = arith.constant 0 : index
    %c0_1 = arith.constant 0 : index
    %3 = vector.load %arg2[%c0, %c0_1] : memref<8x128xbf16, #tpu.memory_space<vmem>>, vector<8x128xbf16>
    %c0_2 = arith.constant 0 : index
    %c0_3 = arith.constant 0 : index
    %4 = vector.load %arg3[%c0_2, %c0_3] : memref<16x128xbf16, #tpu.memory_space<vmem>>, vector<16x128xbf16>
    %cst = arith.constant dense<0.000000e+00> : vector<8x16xf32>
    %5 = tpu.matmul %3, %4, %cst {dimension_numbers = #tpu.dot_dimension_numbers<[1], [1], [0], [0], [0, 0, 1, 0], [], []>} : vector<8x128xbf16>, vector<16x128xbf16>, vector<8x16xf32> -> vector<8x16xf32>
    %c0_4 = arith.constant 0 : index
    %c0_5 = arith.constant 0 : index
    %6 = vector.load %arg5[%c0_4, %c0_5] : memref<8x1xf32, #tpu.memory_space<vmem>>, vector<8x1xf32>
    %c1 = arith.constant 1 : index
    %c0_6 = arith.constant 0 : index
    %7 = vector.load %arg6[%c1, %c0_6] : memref<8x16xf32, #tpu.memory_space<vmem>>, vector<1x16xf32>
    %cst_7 = arith.constant 2.000000e+00 : f32
    %8 = vector.broadcast %cst_7 : f32 to vector<8x16xf32>
    %9 = arith.mulf %8, %5 : vector<8x16xf32>
    %10 = vector.broadcast %7 : vector<1x16xf32> to vector<8x16xf32>
    %11 = arith.subf %10, %9 : vector<8x16xf32>
    %12 = vector.broadcast %6 : vector<8x1xf32> to vector<8x16xf32>
    %13 = arith.addf %12, %11 : vector<8x16xf32>
    %cst_8 = arith.constant 0.000000e+00 : f32
    %14 = vector.broadcast %cst_8 : f32 to vector<8x16xf32>
    %15 = arith.maximumf %13, %14 : vector<8x16xf32>
    %16 = math.sqrt %15 : vector<8x16xf32>
    %c2 = arith.constant 2 : index
    %c0_9 = arith.constant 0 : index
    %17 = vector.load %arg6[%c2, %c0_9] : memref<8x16xf32, #tpu.memory_space<vmem>>, vector<1x16xf32>
    %c0_10 = arith.constant 0 : index
    %c0_11 = arith.constant 0 : index
    %18 = vector.load %arg4[%c0_10, %c0_11] : memref<8x1xf32, #tpu.memory_space<vmem>>, vector<8x1xf32>
    %c0_12 = arith.constant 0 : index
    %c0_13 = arith.constant 0 : index
    %19 = vector.load %arg6[%c0_12, %c0_13] : memref<8x16xf32, #tpu.memory_space<vmem>>, vector<1x16xf32>
    %20 = vector.broadcast %18 : vector<8x1xf32> to vector<8x16xf32>
    %21 = vector.broadcast %19 : vector<1x16xf32> to vector<8x16xf32>
    %22 = arith.cmpf oeq, %20, %21 : vector<8x16xf32>
    %cst_14 = arith.constant 0.000000e+00 : f32
    %23 = vector.broadcast %cst_14 : f32 to vector<1x16xf32>
    %24 = arith.subf %23, %17 : vector<1x16xf32>
    %25 = vector.shape_cast %17 : vector<1x16xf32> to vector<1x16xf32>
    %26 = vector.broadcast %25 : vector<1x16xf32> to vector<8x16xf32>
    %27 = vector.shape_cast %24 : vector<1x16xf32> to vector<1x16xf32>
    %28 = vector.broadcast %27 : vector<1x16xf32> to vector<8x16xf32>
    %29 = arith.select %22, %26, %28 : vector<8x16xi1>, vector<8x16xf32>
    %30 = arith.mulf %16, %29 : vector<8x16xf32>
    %c0_15 = arith.constant 0 : index
    %c0_16 = arith.constant 0 : index
    %31 = vector.load %arg8[%c0_15, %c0_16] : memref<8x1xf32, #tpu.memory_space<vmem>>, vector<8x1xf32>
    %cst_17 = arith.constant dense<0.000000e+00> : vector<8xf32>
    %32 = vector.multi_reduction <add>, %30, %cst_17 [1] : vector<8x16xf32> to vector<8xf32>
    %33 = vector.shape_cast %32 : vector<8xf32> to vector<8x1xf32>
    %34 = arith.addf %31, %33 : vector<8x1xf32>
    %c0_18 = arith.constant 0 : index
    %c0_19 = arith.constant 0 : index
    %35 = vector.load %arg8[%c0_18, %c0_19] : memref<8x1xf32, #tpu.memory_space<vmem>>, vector<8x1xf32>
    tpu.vector_store %arg8[%c0_18, %c0_19], %34 {strides = array<i32>} : memref<8x1xf32, #tpu.memory_space<vmem>>, vector<8x1xf32>,
    %c8_i32 = arith.constant 8 : i32
    %36 = arith.muli %arg0, %c8_i32 : i32
    %c1_i32 = arith.constant 1 : i32
    %37 = arith.addi %arg1, %c1_i32 : i32
    %c16_i32 = arith.constant 16 : i32
    %38 = arith.muli %37, %c16_i32 : i32
    %39 = arith.cmpi slt, %36, %38 : i32
    %c16_i32_20 = arith.constant 16 : i32
    %40 = arith.muli %arg1, %c16_i32_20 : i32
    %c1_i32_21 = arith.constant 1 : i32
    %41 = arith.addi %arg0, %c1_i32_21 : i32
    %c8_i32_22 = arith.constant 8 : i32
    %42 = arith.muli %41, %c8_i32_22 : i32
    %43 = arith.cmpi slt, %40, %42 : i32
    %44 = arith.andi %39, %43 : i1
    %45 = arith.extui %44 : i1 to i32
    %c0_i32_23 = arith.constant 0 : i32
    %46 = arith.cmpi ne, %45, %c0_i32_23 : i32
    scf.if %46 {
      %c8_i32_26 = arith.constant 8 : i32
      %50 = arith.muli %arg0, %c8_i32_26 : i32
      %51 = tpu.iota {dimensions = array<i32: 0>} : vector<8x16xi32>
      %52 = vector.broadcast %50 : i32 to vector<8x16xi32>
      %53 = arith.addi %52, %51 : vector<8x16xi32>
      %c16_i32_27 = arith.constant 16 : i32
      %54 = arith.muli %arg1, %c16_i32_27 : i32
      %55 = tpu.iota {dimensions = array<i32: 1>} : vector<8x16xi32>
      %56 = vector.broadcast %54 : i32 to vector<8x16xi32>
      %57 = arith.addi %56, %55 : vector<8x16xi32>
      %58 = arith.cmpi eq, %53, %57 : vector<8x16xi32>
      %cst_28 = arith.constant 0.000000e+00 : f32
      %59 = vector.broadcast %cst_28 : f32 to vector<8x16xf32>
      %60 = arith.select %58, %30, %59 : vector<8x16xi1>, vector<8x16xf32>
      %c0_29 = arith.constant 0 : index
      %c0_30 = arith.constant 0 : index
      %61 = vector.load %arg8[%c0_29, %c0_30] : memref<8x1xf32, #tpu.memory_space<vmem>>, vector<8x1xf32>
      %cst_31 = arith.constant dense<0.000000e+00> : vector<8xf32>
      %62 = vector.multi_reduction <add>, %60, %cst_31 [1] : vector<8x16xf32> to vector<8xf32>
      %63 = vector.shape_cast %62 : vector<8xf32> to vector<8x1xf32>
      %64 = arith.subf %61, %63 : vector<8x1xf32>
      %c0_32 = arith.constant 0 : index
      %c0_33 = arith.constant 0 : index
      %65 = vector.load %arg8[%c0_32, %c0_33] : memref<8x1xf32, #tpu.memory_space<vmem>>, vector<8x1xf32>
      tpu.vector_store %arg8[%c0_32, %c0_33], %64 {strides = array<i32>} : memref<8x1xf32, #tpu.memory_space<vmem>>, vector<8x1xf32>,
    } else {
    }
    %c0_i32_24 = arith.constant 0 : i32
    %47 = arith.cmpi eq, %arg1, %c0_i32_24 : i32
    %48 = arith.extui %47 : i1 to i32
    %c0_i32_25 = arith.constant 0 : i32
    %49 = arith.cmpi ne, %48, %c0_i32_25 : i32
    scf.if %49 {
      %c0_26 = arith.constant 0 : index
      %c0_27 = arith.constant 0 : index
      %50 = vector.load %arg8[%c0_26, %c0_27] : memref<8x1xf32, #tpu.memory_space<vmem>>, vector<8x1xf32>
      %cst_28 = arith.constant 1.000000e+00 : f32
      %51 = vector.broadcast %cst_28 : f32 to vector<8x1xf32>
      %52 = arith.addf %51, %50 : vector<8x1xf32>
      %cst_29 = arith.constant 0.000000e+00 : f32
      %53 = vector.broadcast %cst_29 : f32 to vector<8x1xf32>
      %54 = arith.maximumf %52, %53 : vector<8x1xf32>
      %c0_30 = arith.constant 0 : index
      %c0_31 = arith.constant 0 : index
      %55 = vector.load %arg7[%c0_30, %c0_31] : memref<8x1xf32, #tpu.memory_space<vmem>>, vector<8x1xf32>
      tpu.vector_store %arg7[%c0_30, %c0_31], %54 {strides = array<i32>} : memref<8x1xf32, #tpu.memory_space<vmem>>, vector<8x1xf32>,
    } else {
    }
    return
  }
  func.func @transform_0(%arg0: i32, %arg1: i32) -> (i32, i32) {
    %c0_i32 = arith.constant 0 : i32
    %c0_i32_0 = arith.constant 0 : i32
    return %arg0, %c0_i32 : i32, i32
  }
  func.func @transform_1(%arg0: i32, %arg1: i32) -> (i32, i32) {
    %c0_i32 = arith.constant 0 : i32
    %c0_i32_0 = arith.constant 0 : i32
    return %arg1, %c0_i32 : i32, i32
  }
  func.func @transform_2(%arg0: i32, %arg1: i32) -> (i32, i32) {
    %c0_i32 = arith.constant 0 : i32
    %c0_i32_0 = arith.constant 0 : i32
    return %arg0, %c0_i32 : i32, i32
  }
  func.func @transform_3(%arg0: i32, %arg1: i32) -> (i32, i32) {
    %c0_i32 = arith.constant 0 : i32
    %c0_i32_0 = arith.constant 0 : i32
    return %arg0, %c0_i32 : i32, i32
  }
  func.func @transform_4(%arg0: i32, %arg1: i32) -> (i32, i32) {
    %c0_i32 = arith.constant 0 : i32
    %c0_i32_0 = arith.constant 0 : i32
    return %c0_i32, %arg1 : i32, i32
  }
  func.func @transform_5(%arg0: i32, %arg1: i32) -> (i32, i32) {
    %c0_i32 = arith.constant 0 : i32
    %c0_i32_0 = arith.constant 0 : i32
    return %arg0, %c0_i32 : i32, i32
  }
}

</mosaic_0001>

<llo_original>
// kernel: tpu_custom_call.1
$region0: #{tpu_custom_call.1}
  #allocation0 [shape = 'u32[]', space=smem, size = 0x4, offset = 0x4, fixed_abs, tag = 'smem constant byte address 0x4 - core index']
  #allocation1 [shape = 'u32[144,128]{1,0:T(1,128)}', space=vmem, size = 0x12000, scoped, tag = 'internal scratch']
  #allocation2 [shape = 'f32[8,1]{1,0:T(8,128)}', space=vmem, size = 0x1000, scoped, tag = 'scratch operand']
  %s0 = inlined_call_operand.vmem [shape: bf16[16,128], index: 0, kind: input, shape index: {}]
  %s1 = inlined_call_operand.vmem [shape: bf16[16,128], index: 1, kind: input, shape index: {}]
  %s2 = inlined_call_operand.vmem [shape: f32[16,1], index: 2, kind: input, shape index: {}]
  %s3 = inlined_call_operand.vmem [shape: f32[16,1], index: 3, kind: input, shape index: {}]
  %s4 = inlined_call_operand.vmem [shape: f32[8,16], index: 4, kind: input, shape index: {}]
  %s5 = inlined_call_operand.vmem [shape: f32[16,1], index: 5, kind: output, shape index: {}]
  %s6 = sld [smem:[#allocation0]]
  $region65: #{tpu_custom_call.1} parent=0
    _
  %s8 = ssub.s32 1, %s6
  %s9 = scalar_select 0, %s8, %s6
  loop: start=0, step=1, limit=4
  $region2: #{tpu_custom_call.1} parent=0 // loop_pre_header
    _
  $region3: #{tpu_custom_call.1} parent=0 // loop_header
    %s11 = sphi 0, %s15
    %p12 = scmp.ge.s32.totalorder %s11, 4
    %s18 = sphi 0, %s30
    %s19 = sphi 0, %s26
    %s20 = sphi 0, %s18
    %s21 = sphi 0, %s19
    %s22 = sphi 0, %s20
    %s23 = sphi 0, %s21
    %s33 = sphi 0, %s35
    %s36 = sphi 0, %s33
    %s37 = sphi 0, %s36
    %s53 = sphi 0, %s37
    %s59 = sphi 0, %s61
    %s62 = sphi 0, %s59
    %s63 = sphi 0, %s62
    %s79 = sphi 0, %s63
    %s85 = sphi 0, %s87
    %s88 = sphi 0, %s85
    %s89 = sphi 0, %s88
    %s105 = sphi 0, %s89
    %s111 = sphi 0, %s113
    %s114 = sphi 0, %s111
    %s115 = sphi 0, %s114
    %s131 = sphi 0, %s115
    %s137 = sphi 0, %s139
    %s140 = sphi 0, %s137
    %s141 = sphi 0, %s140
    %s157 = sphi 0, %s141
    %s163 = sphi 0, %s165
    %s166 = sphi 0, %s163
    %s167 = sphi 0, %s166
    %s183 = sphi 0, %s167
  $region4: #{tpu_custom_call.1} parent=0 // loop_header_branch
    %14 = sbr.rel (%p12) target = $region8
  $region5: #{tpu_custom_call.1} parent=0 // loop_body
    %s16 = ssub.s32 %s11, 1
    %s17 = ssub.s32 %s11, 2
    %s24 = sadd.s32 1, %s19
    %p25 = scmp.ge.s32.totalorder %s24, 1
    %s26 = scalar_select %p25, 0, %s24
    %s27 = sadd.s32 1, %s18
    %s28 = scalar_select %p25, %s27, %s18
    %p29 = scmp.ge.s32.totalorder %s28, 2
    %s30 = scalar_select %p29, 0, %s28
    %s31 = ssub.s32 %s18, %s30
    %p32 = scmp.eq.s32.totalorder %s31, 0
    %s34 = sadd.s32 %s33, 1
    %s35 = scalar_select %p32, %s33, %s34
    %p38 = pneg %p32
    %p39 = scmp.eq.s32.totalorder %s11, 1
    %p40 = por %p38, %p39
    %p41 = scmp.ne.s32.totalorder %s33, %s36
    %p42 = scmp.eq.s32.totalorder %s11, 0
    %p43 = por %p41, %p42
    %p44 = scmp.ne.s32.totalorder %s33, %s36
    %p45 = scmp.eq.s32.totalorder %s16, 1
    %p46 = por %p44, %p45
    %p47 = scmp.ne.s32.totalorder %s36, %s37
    %p48 = scmp.eq.s32.totalorder %s16, 0
    %p49 = por %p47, %p48
    %p50 = scmp.ne.s32.totalorder %s36, %s37
    %p51 = scmp.eq.s32.totalorder %s17, 1
    %p52 = por %p50, %p51
    %p54 = scmp.ne.s32.totalorder %s37, %s53
    %p55 = scmp.eq.s32.totalorder %s17, 0
    %p56 = por %p54, %p55
    %s57 = ssub.s32 %s19, %s26
    %p58 = scmp.eq.s32.totalorder %s57, 0
    %s60 = sadd.s32 %s59, 1
    %s61 = scalar_select %p58, %s59, %s60
    %p64 = pneg %p58
    %p65 = scmp.eq.s32.totalorder %s11, 1
    %p66 = por %p64, %p65
    %p67 = scmp.ne.s32.totalorder %s59, %s62
    %p68 = scmp.eq.s32.totalorder %s11, 0
    %p69 = por %p67, %p68
    %p70 = scmp.ne.s32.totalorder %s59, %s62
    %p71 = scmp.eq.s32.totalorder %s16, 1
    %p72 = por %p70, %p71
    %p73 = scmp.ne.s32.totalorder %s62, %s63
    %p74 = scmp.eq.s32.totalorder %s16, 0
    %p75 = por %p73, %p74
    %p76 = scmp.ne.s32.totalorder %s62, %s63
    %p77 = scmp.eq.s32.totalorder %s17, 1
    %p78 = por %p76, %p77
    %p80 = scmp.ne.s32.totalorder %s63, %s79
    %p81 = scmp.eq.s32.totalorder %s17, 0
    %p82 = por %p80, %p81
    %s83 = ssub.s32 %s18, %s30
    %p84 = scmp.eq.s32.totalorder %s83, 0
    %s86 = sadd.s32 %s85, 1
    %s87 = scalar_select %p84, %s85, %s86
    %p90 = pneg %p84
    %p91 = scmp.eq.s32.totalorder %s11, 1
    %p92 = por %p90, %p91
    %p93 = scmp.ne.s32.totalorder %s85, %s88
    %p94 = scmp.eq.s32.totalorder %s11, 0
    %p95 = por %p93, %p94
    %p96 = scmp.ne.s32.totalorder %s85, %s88
    %p97 = scmp.eq.s32.totalorder %s16, 1
    %p98 = por %p96, %p97
    %p99 = scmp.ne.s32.totalorder %s88, %s89
    %p100 = scmp.eq.s32.totalorder %s16, 0
    %p101 = por %p99, %p100
    %p102 = scmp.ne.s32.totalorder %s88, %s89
    %p103 = scmp.eq.s32.totalorder %s17, 1
    %p104 = por %p102, %p103
    %p106 = scmp.ne.s32.totalorder %s89, %s105
    %p107 = scmp.eq.s32.totalorder %s17, 0
    %p108 = por %p106, %p107
    %s109 = ssub.s32 %s18, %s30
    %p110 = scmp.eq.s32.totalorder %s109, 0
    %s112 = sadd.s32 %s111, 1
    %s113 = scalar_select %p110, %s111, %s112
    %p116 = pneg %p110
    %p117 = scmp.eq.s32.totalorder %s11, 1
    %p118 = por %p116, %p117
    %p119 = scmp.ne.s32.totalorder %s111, %s114
    %p120 = scmp.eq.s32.totalorder %s11, 0
    %p121 = por %p119, %p120
    %p122 = scmp.ne.s32.totalorder %s111, %s114
    %p123 = scmp.eq.s32.totalorder %s16, 1
    %p124 = por %p122, %p123
    %p125 = scmp.ne.s32.totalorder %s114, %s115
    %p126 = scmp.eq.s32.totalorder %s16, 0
    %p127 = por %p125, %p126
    %p128 = scmp.ne.s32.totalorder %s114, %s115
    %p129 = scmp.eq.s32.totalorder %s17, 1
    %p130 = por %p128, %p129
    %p132 = scmp.ne.s32.totalorder %s115, %s131
    %p133 = scmp.eq.s32.totalorder %s17, 0
    %p134 = por %p132, %p133
    %s135 = ssub.s32 %s19, %s26
    %p136 = scmp.eq.s32.totalorder %s135, 0
    %s138 = sadd.s32 %s137, 1
    %s139 = scalar_select %p136, %s137, %s138
    %p142 = pneg %p136
    %p143 = scmp.eq.s32.totalorder %s11, 1
    %p144 = por %p142, %p143
    %p145 = scmp.ne.s32.totalorder %s137, %s140
    %p146 = scmp.eq.s32.totalorder %s11, 0
    %p147 = por %p145, %p146
    %p148 = scmp.ne.s32.totalorder %s137, %s140
    %p149 = scmp.eq.s32.totalorder %s16, 1
    %p150 = por %p148, %p149
    %p151 = scmp.ne.s32.totalorder %s140, %s141
    %p152 = scmp.eq.s32.totalorder %s16, 0
    %p153 = por %p151, %p152
    %p154 = scmp.ne.s32.totalorder %s140, %s141
    %p155 = scmp.eq.s32.totalorder %s17, 1
    %p156 = por %p154, %p155
    %p158 = scmp.ne.s32.totalorder %s141, %s157
    %p159 = scmp.eq.s32.totalorder %s17, 0
    %p160 = por %p158, %p159
    %s161 = ssub.s32 %s18, %s30
    %p162 = scmp.eq.s32.totalorder %s161, 0
    %s164 = sadd.s32 %s163, 1
    %s165 = scalar_select %p162, %s163, %s164
    %p168 = pneg %p162
    %p169 = scmp.eq.s32.totalorder %s11, 1
    %p170 = por %p168, %p169
    %p171 = scmp.ne.s32.totalorder %s163, %s166
    %p172 = scmp.eq.s32.totalorder %s11, 0
    %p173 = por %p171, %p172
    %p174 = scmp.ne.s32.totalorder %s163, %s166
    %p175 = scmp.eq.s32.totalorder %s16, 1
    %p176 = por %p174, %p175
    %p177 = scmp.ne.s32.totalorder %s166, %s167
    %p178 = scmp.eq.s32.totalorder %s16, 0
    %p179 = por %p177, %p178
    %p180 = scmp.ne.s32.totalorder %s166, %s167
    %p181 = scmp.eq.s32.totalorder %s17, 1
    %p182 = por %p180, %p181
    %p184 = scmp.ne.s32.totalorder %s167, %s183
    %p185 = scmp.eq.s32.totalorder %s17, 0
    %p186 = por %p184, %p185
    %p187 = scmp.le.s32.totalorder 1, %s11
    %p188 = scmp.lt.s32.totalorder %s11, 3
    %p189 = pnand %p187, %p188
    %p190 = pneg %p189
    // Predicated region
    $region9: #{tpu_custom_call.1} parent=5 // pred_check
      _
    $region10: #{tpu_custom_call.1} parent=5 // pred_check_branch
      %192 = sbr.rel (%p189) target = $region12
    $region11: #{tpu_custom_call.1} parent=5 // pred_region
      %s193 = ssub.s32 %s11, 1
      // Predicated region
      $region13: #{tpu_custom_call.1} parent=11 // pred_check
        %p194 = pneg %p75
      $region14: #{tpu_custom_call.1} parent=11 // pred_check_branch
        %196 = sbr.rel (%p194) target = $region16
      $region15: #{tpu_custom_call.1} parent=11 // pred_region
        %s197 = smul.u32 2, %s21
        %p198 = scmp.lt.s32.totalorder %s197, 1
        %s199 = scalar_select %p198, %s197, 1
        %s200 = smul.addr %s199, 4
        %s201 = scalar_lea.vmem %s1, %s200
        %s202 = smul.u32 2, %s21
      $region16: #{tpu_custom_call.1} parent=11 // pred_fallthru
        _
      // Predicated region
      $region17: #{tpu_custom_call.1} parent=11 // pred_check
        %p203 = pneg %p153
      $region18: #{tpu_custom_call.1} parent=11 // pred_check_branch
        %205 = sbr.rel (%p203) target = $region20
      $region19: #{tpu_custom_call.1} parent=11 // pred_region
        %p206 = scmp.lt.s32.totalorder %s21, 0
        %s207 = scalar_select %p206, %s21, 0
        %s208 = smul.addr %s207, 8
        %s209 = scalar_lea.vmem %s4, %s208
      $region20: #{tpu_custom_call.1} parent=11 // pred_fallthru
        _
    $region12: #{tpu_custom_call.1} parent=5 // pred_fallthru
      _
    %p210 = scmp.lt.s32.totalorder %s11, 2
    // Predicated region
    $region21: #{tpu_custom_call.1} parent=5 // pred_check
      %p211 = pneg %p210
    $region22: #{tpu_custom_call.1} parent=5 // pred_check_branch
      %213 = sbr.rel (%p211) target = $region24
    $region23: #{tpu_custom_call.1} parent=5 // pred_region
      // Predicated region
      $region25: #{tpu_custom_call.1} parent=23 // pred_check
        %p214 = pneg %p43
      $region26: #{tpu_custom_call.1} parent=23 // pred_check_branch
        %216 = sbr.rel (%p214) target = $region28
      $region27: #{tpu_custom_call.1} parent=23 // pred_region
        %p217 = scmp.lt.s32.totalorder %s18, 1
        %s218 = scalar_select %p217, %s18, 1
        %s219 = smul.addr %s218, 4
        %s220 = scalar_lea.vmem %s0, %s219
      $region28: #{tpu_custom_call.1} parent=23 // pred_fallthru
        _
      // Predicated region
      $region29: #{tpu_custom_call.1} parent=23 // pred_check
        %p221 = pneg %p95
      $region30: #{tpu_custom_call.1} parent=23 // pred_check_branch
        %223 = sbr.rel (%p221) target = $region32
      $region31: #{tpu_custom_call.1} parent=23 // pred_region
        %p224 = scmp.lt.s32.totalorder %s18, 1
        %s225 = scalar_select %p224, %s18, 1
        %s226 = smul.addr %s225, 8
        %s227 = scalar_lea.vmem %s2, %s226
      $region32: #{tpu_custom_call.1} parent=23 // pred_fallthru
        _
      // Predicated region
      $region33: #{tpu_custom_call.1} parent=23 // pred_check
        %p228 = pneg %p121
      $region34: #{tpu_custom_call.1} parent=23 // pred_check_branch
        %230 = sbr.rel (%p228) target = $region36
      $region35: #{tpu_custom_call.1} parent=23 // pred_region
        %p231 = scmp.lt.s32.totalorder %s18, 1
        %s232 = scalar_select %p231, %s18, 1
        %s233 = smul.addr %s232, 8
        %s234 = scalar_lea.vmem %s3, %s233
      $region36: #{tpu_custom_call.1} parent=23 // pred_fallthru
        _
    $region24: #{tpu_custom_call.1} parent=5 // pred_fallthru
      _
    %p235 = scmp.le.s32.totalorder 1, %s11
    %p236 = scmp.lt.s32.totalorder %s11, 3
    %p237 = pnand %p235, %p236
    %p238 = pneg %p237
    // Predicated region
    $region37: #{tpu_custom_call.1} parent=5 // pred_check
      _
    $region38: #{tpu_custom_call.1} parent=5 // pred_check_branch
      %240 = sbr.rel (%p237) target = $region40
    $region39: #{tpu_custom_call.1} parent=5 // pred_region
      %s241 = ssub.s32 %s11, 1
      %p242 = scmp.lt.s32.totalorder %s20, 1
      %s243 = scalar_select %p242, %s20, 1
      %s244 = smul.addr %s243, 4
      %s245 = scalar_lea.vmem %s0, %s244
      %p246 = pneg %p49
      %p247 = pneg %p46
      %s248 = smul.u32 2, %s21
      %p249 = scmp.lt.s32.totalorder %s248, 1
      %s250 = scalar_select %p249, %s248, 1
      %s251 = smul.addr %s250, 4
      %s252 = scalar_lea.vmem %s1, %s251
      %p253 = pneg %p75
      %p254 = pneg %p72
      %p255 = scmp.lt.s32.totalorder %s20, 1
      %s256 = scalar_select %p255, %s20, 1
      %s257 = smul.addr %s256, 8
      %s258 = scalar_lea.vmem %s2, %s257
      %p259 = pneg %p101
      %p260 = pneg %p98
      %p261 = scmp.lt.s32.totalorder %s20, 1
      %s262 = scalar_select %p261, %s20, 1
      %s263 = smul.addr %s262, 8
      %s264 = scalar_lea.vmem %s3, %s263
      %p265 = pneg %p127
      %p266 = pneg %p124
      %p267 = scmp.lt.s32.totalorder %s21, 0
      %s268 = scalar_select %p267, %s21, 0
      %s269 = smul.addr %s268, 8
      %s270 = scalar_lea.vmem %s4, %s269
      %p271 = pneg %p153
      %p272 = pneg %p150
      %p273 = pneg %p179
      %p274 = pneg %p176
      %p275 = scmp.lt.s32.totalorder %s20, 1
      %s276 = scalar_select %p275, %s20, 1
      %s277 = smul.addr %s276, 8
      %s278 = scalar_lea.vmem %s5, %s277
      %p279 = scmp.lt.s32.totalorder %s20, 1
      %s280 = scalar_select %p279, %s20, 1
      %s281 = smul.addr %s280, 4
      %s282 = scalar_lea.vmem %s0, %s281
      %s283 = smul.u32 2, %s21
      %p284 = scmp.lt.s32.totalorder %s283, 1
      %s285 = scalar_select %p284, %s283, 1
      %s286 = smul.addr %s285, 4
      %s287 = scalar_lea.vmem %s1, %s286
      %s288 = smul.u32 2, %s21
      %p289 = scmp.lt.s32.totalorder %s20, 1
      %s290 = scalar_select %p289, %s20, 1
      %s291 = smul.addr %s290, 8
      %s292 = scalar_lea.vmem %s2, %s291
      %p293 = scmp.lt.s32.totalorder %s20, 1
      %s294 = scalar_select %p293, %s20, 1
      %s295 = smul.addr %s294, 8
      %s296 = scalar_lea.vmem %s3, %s295
      %p297 = scmp.lt.s32.totalorder %s21, 0
      %s298 = scalar_select %p297, %s21, 0
      %s299 = smul.addr %s298, 8
      %s300 = scalar_lea.vmem %s4, %s299
      %p301 = scmp.lt.s32.totalorder %s20, 1
      %s302 = scalar_select %p301, %s20, 1
      %s303 = smul.addr %s302, 8
      %s304 = scalar_lea.vmem %s5, %s303
      %p306 = scmp.eq.s32.totalorder %s21, 0
      // Predicated region
      $region41: #{tpu_custom_call.1} parent=39 // pred_check
        %p307 = pneg %p306
      $region42: #{tpu_custom_call.1} parent=39 // pred_check_branch
        %309 = sbr.rel (%p307) target = $region44
      $region43: #{tpu_custom_call.1} parent=39 // pred_region
        %vm310 = vcmask 7168
        %311 = vst.msk [vmem:[#allocation2] sm:$0xff] %vm310, 0.0
      $region44: #{tpu_custom_call.1} parent=39 // pred_fallthru
        _
      %v312 = vld [vmem:[%s282] sm:$0xf]
      %v313 = vld [vmem:[%s287] sm:$0xf]
      %v314 = vld [vmem:[%s287 + $0x4] sm:$0xf]
      %v317 = vunpack.c.l.b16 %v313
      %v318 = vunpack.c.l.b16 %v314
      %v319 = vpack.c.b16 %v318, %v317
      %321 = vmatprep.subr.bf16.mxu0 0
      %322 = vmatpush1.bf16.xpose.msra.mxu0 %v319
      %323 = vmatprep.subr.bf16.mxu0 0
      %324 = vmatpush1.bf16.xpose.msra.mxu0 0
      %325 = vmatprep.subr.bf16.mxu0 0
      %326 = vmatpush1.bf16.xpose.msra.mxu0 0
      %327 = vmatprep.subr.bf16.mxu0 0
      %328 = vmatpush1.bf16.xpose.msra.mxu0 0
      %329 = vmatprep.subr.bf16.mxu0 0
      %330 = vmatpush1.bf16.xpose.msra.mxu0 0
      %331 = vmatprep.subr.bf16.mxu0 0
      %332 = vmatpush1.bf16.xpose.msra.mxu0 0
      %333 = vmatprep.subr.bf16.mxu0 0
      %334 = vmatpush1.bf16.xpose.msra.mxu0 0
      %335 = vmatprep.subr.bf16.mxu0 0
      %336 = vmatpush1.bf16.xpose.msra.mxu0 0
      %337 = vmatprep.subr.bf16.mxu0 0
      %338 = vmatpush1.bf16.xpose.msra.mxu0 0
      %339 = vmatprep.subr.bf16.mxu0 0
      %340 = vmatpush1.bf16.xpose.msra.mxu0 0
      %341 = vmatprep.subr.bf16.mxu0 0
      %342 = vmatpush1.bf16.xpose.msra.mxu0 0
      %343 = vmatprep.subr.bf16.mxu0 0
      %344 = vmatpush1.bf16.xpose.msra.mxu0 0
      %345 = vmatprep.subr.bf16.mxu0 0
      %346 = vmatpush1.bf16.xpose.msra.mxu0 0
      %347 = vmatprep.subr.bf16.mxu0 0
      %348 = vmatpush1.bf16.xpose.msra.mxu0 0
      %349 = vmatprep.subr.bf16.mxu0 0
      %350 = vmatpush1.bf16.xpose.msra.mxu0 0
      %351 = vmatprep.subr.bf16.mxu0 0
      %352 = vmatpush1.bf16.xpose.msra.mxu0 0
      %353 = vmatprep.mubr.bf16.mxu0 0
      %354 = vmatmul.mubr.bf16.gmra.mrb[0].mxu0 %v312
      %v355 = vpop.f32.mrb[0].mxu0
      %v356 = vadd.f32 0.0, %v355
      %v357 = vpop.f32.mrb[0].mxu0
      %v358 = vpop.f32.mrb[0].mxu0
      %v359 = vpop.f32.mrb[0].mxu0
      %360 = vdwg.mxu0
      %v361 = vld [vmem:[%s296] sm:$0xff]
      %v362 = vld [vmem:[%s300 + $0x1] sm:$0x1]
      %v363 = vmul.f32 %v356, 2.0
      %v364 = vlaneseq
      %v365 = vshrl.u32 %v364, 7
      %v366 = vsub.s32 0, %v365
      %v367 = vrot.slane %v362, %v366
      %v368 = vsub.f32 %v367, %v363
      %370 = vset.pattern.permute.xlu0 0
      %371 = vperm.xlu0 %370, %v361
      %v372 = vpop.permute.xlu0 %371
      %v374 = vadd.f32 %v372, %v368
      %v375 = vmax.f32 %v374, 0.0
      %v376 = vrsqrt.pop %v375
      %v377 = vmul.f32 %v375, %v376
      %vm378 = vcmp.eq.f32.partialorder %v375, inf
      %v379 = vsel %vm378, %v375, %v377
      %vm380 = vcmp.eq.f32.partialorder %v375, 0.0
      %v381 = vand.u32 %v375, 2147483648
      %v382 = vsel %vm380, %v381, %v379
      %v383 = vld [vmem:[%s300 + $0x2] sm:$0x1]
      %v384 = vld [vmem:[%s292] sm:$0xff]
      %v385 = vld [vmem:[%s300] sm:$0x1]
      %387 = vset.pattern.permute.xlu0 0
      %388 = vperm.xlu0 %387, %v384
      %v389 = vpop.permute.xlu0 %388
      %v391 = vlaneseq
      %v392 = vshrl.u32 %v391, 7
      %v393 = vsub.s32 0, %v392
      %v394 = vrot.slane %v385, %v393
      %vm395 = vcmp.eq.f32.partialorder %v389, %v394
      %v396 = vsub.f32 0.0, %v383
      %v397 = vlaneseq
      %v398 = vshrl.u32 %v397, 7
      %v399 = vsub.s32 0, %v398
      %v400 = vrot.slane %v383, %v399
      %v401 = vlaneseq
      %v402 = vshrl.u32 %v401, 7
      %v403 = vsub.s32 0, %v402
      %v404 = vrot.slane %v396, %v403
      %v405 = vsel %vm395, %v400, %v404
      %v406 = vmul.f32 %v382, %v405
      %v407 = vld [vmem:[#allocation2] sm:$0xff]
      %vm408 = vcmask 130048
      %v409 = vsel %vm408, %v406, 0.0
      %410 = vadd.xlane.f32.xlu0 %v409
      %v411 = vpop.xlane.xlu0 %410
      %v412 = vadd.f32 %v407, %v411
      %vm413 = vcmask 7168
      %414 = vst.msk [vmem:[#allocation2] sm:$0xff] %vm413, %v412
      %s415 = smul.u32 %s20, 8
      %s416 = sadd.s32 %s21, 1
      %s417 = smul.u32 %s416, 16
      %p418 = scmp.lt.s32.totalorder %s415, %s417
      %s419 = smul.u32 %s21, 16
      %s420 = sadd.s32 %s20, 1
      %s421 = smul.u32 %s420, 8
      %p422 = scmp.lt.s32.totalorder %s419, %s421
      %p423 = pnand %p418, %p422
      %p424 = pneg %p423
      // Predicated region
      $region45: #{tpu_custom_call.1} parent=39 // pred_check
        _
      $region46: #{tpu_custom_call.1} parent=39 // pred_check_branch
        %426 = sbr.rel (%p423) target = $region48
      $region47: #{tpu_custom_call.1} parent=39 // pred_region
        %v427 = vlaneseq
        %v428 = vshrl.u32 %v427, 7
        %v429 = vstv %s415
        %v430 = vadd.s32 %v429, %v428
        %v431 = vlaneseq
        %v432 = vand.u32 %v431, 127
        %v433 = vstv %s419
        %v434 = vadd.s32 %v433, %v432
        %vm435 = vcmp.eq.s32.totalorder %v430, %v434
        %v436 = vsel %vm435, %v406, 0.0
        %v437 = vld [vmem:[#allocation2] sm:$0xff]
        %v438 = vsel %vm408, %v436, 0.0
        %439 = vadd.xlane.f32.xlu0 %v438
        %v440 = vpop.xlane.xlu0 %439
        %v441 = vsub.f32 %v437, %v440
        %442 = vst.msk [vmem:[#allocation2] sm:$0xff] %vm413, %v441
      $region48: #{tpu_custom_call.1} parent=39 // pred_fallthru
        _
      // Predicated region
      $region49: #{tpu_custom_call.1} parent=39 // pred_check
        %p443 = pneg %p306
      $region50: #{tpu_custom_call.1} parent=39 // pred_check_branch
        %445 = sbr.rel (%p443) target = $region52
      $region51: #{tpu_custom_call.1} parent=39 // pred_region
        %v446 = vld [vmem:[#allocation2] sm:$0xff]
        %v447 = vadd.f32 %v446, 1.0
        %v448 = vmax.f32 %v447, 0.0
        %449 = vst.msk [vmem:[%s304] sm:$0xff] %vm413, %v448
      $region52: #{tpu_custom_call.1} parent=39 // pred_fallthru
        _
      %p450 = scmp.lt.s32.totalorder %s20, 1
      %s451 = scalar_select %p450, %s20, 1
      %s452 = smul.addr %s451, 8
      %s453 = scalar_lea.vmem %s5, %s452
      // Predicated region
      $region53: #{tpu_custom_call.1} parent=39 // pred_check
        %p454 = pneg %p176
      $region54: #{tpu_custom_call.1} parent=39 // pred_check_branch
        %456 = sbr.rel (%p454) target = $region56
      $region55: #{tpu_custom_call.1} parent=39 // pred_region
        _
      $region56: #{tpu_custom_call.1} parent=39 // pred_fallthru
        _
    $region40: #{tpu_custom_call.1} parent=5 // pred_fallthru
      _
    %p457 = scmp.le.s32.totalorder 2, %s11
    // Predicated region
    $region57: #{tpu_custom_call.1} parent=5 // pred_check
      %p458 = pneg %p457
    $region58: #{tpu_custom_call.1} parent=5 // pred_check_branch
      %460 = sbr.rel (%p458) target = $region60
    $region59: #{tpu_custom_call.1} parent=5 // pred_region
      %s461 = ssub.s32 %s11, 2
      // Predicated region
      $region61: #{tpu_custom_call.1} parent=59 // pred_check
        %p462 = pneg %p182
      $region62: #{tpu_custom_call.1} parent=59 // pred_check_branch
        %464 = sbr.rel (%p462) target = $region64
      $region63: #{tpu_custom_call.1} parent=59 // pred_region
        %p465 = scmp.lt.s32.totalorder %s22, 1
        %s466 = scalar_select %p465, %s22, 1
        %s467 = smul.addr %s466, 8
        %s468 = scalar_lea.vmem %s5, %s467
      $region64: #{tpu_custom_call.1} parent=59 // pred_fallthru
        _
    $region60: #{tpu_custom_call.1} parent=5 // pred_fallthru
      _
  $region6: #{tpu_custom_call.1} parent=0 // loop_footer
    %s15 = sadd.s32 1, %s11
  $region7: #{tpu_custom_call.1} parent=0 // loop_footer_branch
    %10 = sbr.rel target = $region3
  $region8: #{tpu_custom_call.1} parent=0 // loop_exit
    _

</llo_original>
